<compile_context>
chip_gen: v5e
topology: v5e:2x2
jax: 0.10.0
libtpu: 0.0.40
codegen_flags: <defaults>
</compile_context>

<pallas_src>
import jax
import jax.numpy as jnp
from jax.experimental import pallas as pl
from jax.experimental.pallas import tpu as pltpu


# ----------------------------- kernel body ---------------------------------

def _mlp_kernel(x_ref, w1_ref, b1_ref, w2_ref, b2_ref,
                w3_ref, b3_ref, w4_ref, b4_ref, out_ref):
    # Cast fused into the kernel: x streams as f32, MXU operands are bf16.
    x = x_ref[...].astype(jnp.bfloat16)
    # Layer 1: (TB, D) @ (D, 128) + (1, 128), ReLU   (f32 accumulation)
    h = jnp.dot(x, w1_ref[...], preferred_element_type=jnp.float32)
    h = jnp.maximum(h + b1_ref[...], 0.0).astype(jnp.bfloat16)
    # Layer 2
    h = jnp.dot(h, w2_ref[...], preferred_element_type=jnp.float32)
    h = jnp.maximum(h + b2_ref[...], 0.0).astype(jnp.bfloat16)
    # Layer 3
    h = jnp.dot(h, w3_ref[...], preferred_element_type=jnp.float32)
    h = jnp.maximum(h + b3_ref[...], 0.0).astype(jnp.bfloat16)
    # Output layer, lane-dense 128-wide padded classes, bf16 writeback.
    out_ref[...] = (jnp.dot(h, w4_ref[...], preferred_element_type=jnp.float32)
                    + b4_ref[...]).astype(out_ref.dtype)


# ----------------------------- wrapper --------------------------------------

def _round_up(v, m):
    return ((v + m - 1) // m) * m


def _pick_batch_tile(b, batch_tile):
    """Adaptive batch tile (perf review items 2 & 3)."""
    if b <= 8:
        return b                       # single block == full batch dim (legal)
    b8 = _round_up(b, 8)
    tb = min(batch_tile, b8)
    if b8 // tb < 2:                   # guarantee >= 2 grid steps (v7x: 2 TCs)
        tb = _round_up(pl.cdiv(b8, 2), 8)
    return tb


def prepare_params(params):
    """One-time parameter prep, hoisted out of the forward path.

    Returns bf16 weights (in_features, out_features), f32 (1, n) bias rows,
    with the final layer zero-padded to a lane-dense multiple of 128 columns.
    """
    (w1, b1), (w2, b2), (w3, b3), (w4, b4) = params
    num_classes = w4.shape[1]
    n_out = max(128, _round_up(num_classes, 128))
    w4p = jnp.zeros((w4.shape[0], n_out), jnp.float32).at[:, :num_classes].set(w4)
    b4p = jnp.zeros((1, n_out), jnp.float32).at[:, :num_classes].set(
        b4.reshape(1, -1))

    def wcast(w):
        return w.astype(jnp.bfloat16)

    def bcast(bb):
        return bb.reshape(1, -1).astype(jnp.float32)

    return (wcast(w1), bcast(b1), wcast(w2), bcast(b2), wcast(w3), bcast(b3),
            wcast(w4p), b4p, num_classes)


def mlp_classifier_deep(x, prepared, *, batch_tile=512):
    """x: (b, 3, H, W) float32 -> logits (b, num_classes) float32."""
    (w1b, b1f, w2b, b2f, w3b, b3f, w4b, b4f, num_classes) = prepared

    b = x.shape[0]
    x_flat = x.reshape(b, -1).astype(jnp.float32)   # same order as torch .view(b, -1)
    d = x_flat.shape[1]
    hidden = w1b.shape[1]
    n_out = w4b.shape[1]

    tb = _pick_batch_tile(b, batch_tile)
    grid = (pl.cdiv(b, tb),)

    in_specs = [
        pl.BlockSpec((tb, d), lambda i: (i, 0)),            # x: streams per tile
        pl.BlockSpec((d, hidden), lambda i: (0, 0)),        # w1 (resident)
        pl.BlockSpec((1, hidden), lambda i: (0, 0)),        # b1
        pl.BlockSpec((hidden, hidden), lambda i: (0, 0)),   # w2
        pl.BlockSpec((1, hidden), lambda i: (0, 0)),        # b2
        pl.BlockSpec((hidden, hidden), lambda i: (0, 0)),   # w3
        pl.BlockSpec((1, hidden), lambda i: (0, 0)),        # b3
        pl.BlockSpec((hidden, n_out), lambda i: (0, 0)),    # w4 (lane-padded)
        pl.BlockSpec((1, n_out), lambda i: (0, 0)),         # b4 (lane-padded)
    ]
    out_spec = pl.BlockSpec((tb, n_out), lambda i: (i, 0))

    flops = 2 * b * (d * hidden + 2 * hidden * hidden + hidden * n_out)
    bytes_accessed = (
        b * d * 4                                                  # x (f32 in)
        + (w1b.size + w2b.size + w3b.size + w4b.size) * 2          # bf16 weights
        + (b1f.size + b2f.size + b3f.size + b4f.size) * 4          # f32 biases
        + b * n_out * 2                                            # bf16 out
    )
    cost = pl.CostEstimate(flops=flops, transcendentals=0,
                           bytes_accessed=bytes_accessed)

    out = pl.pallas_call(
        _mlp_kernel,
        out_shape=jax.ShapeDtypeStruct((b, n_out), jnp.bfloat16),
        grid_spec=pltpu.PrefetchScalarGridSpec(
            num_scalar_prefetch=0,
            grid=grid,
            in_specs=in_specs,
            out_specs=out_spec,
        ),
        compiler_params=pltpu.CompilerParams(
            dimension_semantics=("parallel",),
        ),
        cost_estimate=cost,
    )(x_flat, w1b, b1f, w2b, b2f, w3b, b3f, w4b, b4f)

    return out[:, :num_classes].astype(jnp.float32)


# ----------------------------- test helpers ---------------------------------

def init_params(key, h=16, w=16, num_classes=6, hidden=128):
    """Deterministic synthetic parameters (PyTorch-style uniform fan-in init)."""
    dims = [(3 * h * w, hidden), (hidden, hidden), (hidden, hidden),
            (hidden, num_classes)]
    params = []
    for (fan_in, fan_out) in dims:
        key, kw, kb = jax.random.split(key, 3)
        bound = 1.0 / jnp.sqrt(fan_in)
        W = jax.random.uniform(kw, (fan_in, fan_out), jnp.float32, -bound, bound)
        bvec = jax.random.uniform(kb, (1, fan_out), jnp.float32, -bound, bound)
        params.append((W, bvec))
    return params


def _bf16(v):
    return v.astype(jnp.bfloat16).astype(jnp.float32)


def _reference_bf16(x, params):
    """Reference matching the kernel numerics (bf16 operands, f32 accum, bf16 out)."""
    h = _bf16(x.reshape(x.shape[0], -1))
    (w1, b1), (w2, b2), (w3, b3), (w4, b4) = params
    h = _bf16(jnp.maximum(h @ _bf16(w1) + b1, 0.0))
    h = _bf16(jnp.maximum(h @ _bf16(w2) + b2, 0.0))
    h = _bf16(jnp.maximum(h @ _bf16(w3) + b3, 0.0))
    return _bf16(h @ _bf16(w4) + b4)


def _reference_f32(x, params):
    h = x.reshape(x.shape[0], -1)
    (w1, b1), (w2, b2), (w3, b3), (w4, b4) = params
    h = jnp.maximum(h @ w1 + b1, 0.0)
    h = jnp.maximum(h @ w2 + b2, 0.0)
    h = jnp.maximum(h @ w3 + b3, 0.0)
    return h @ w4 + b4


if __name__ == "__main__":
    key = jax.random.PRNGKey(0)
    k_x1, k_x2, k_p = jax.random.split(key, 3)

    H, W, NC = 16, 16, 6
    params = init_params(k_p, h=H, w=W, num_classes=NC, hidden=128)
    prepared = prepare_params(params)          # one-time weight prep (hoisted)

    # Case 1: tiny batch -> single grid step, block == full batch dim.
    x1 = jax.random.normal(k_x1, (2, 3, H, W), jnp.float32)
    out1 = jax.block_until_ready(mlp_classifier_deep(x1, prepared))
    assert out1.shape == (2, NC)

    # Case 2: multi-step grid with a ragged edge tile (b not a tile multiple).
    x2 = jax.random.normal(k_x2, (37, 3, H, W), jnp.float32)
    out2 = jax.block_until_ready(mlp_classifier_deep(x2, prepared, batch_tile=16))
    assert out2.shape == (37, NC)

    for x, out in ((x1, out1), (x2, out2)):
        ref_bf = _reference_bf16(x, params)
        ref_f32 = _reference_f32(x, params)
        # Tight check vs. a reference using the same bf16-rounded numerics.
        assert jnp.allclose(out, ref_bf, atol=1e-2, rtol=1e-2)
        # Loose check vs. the pure-f32 PyTorch-equivalent reference.
        assert jnp.allclose(out, ref_f32, atol=8e-2, rtol=8e-2)

    print("KERNEL_OK")
</pallas_src>

<mosaic_0001>
module attributes {stable_mosaic.version = 11 : i64} {
  func.func @_mlp_kernel(%arg0: i32, %arg1: memref<2x768xf32, #tpu.memory_space<vmem>>, %arg2: memref<768x128xbf16, #tpu.memory_space<vmem>>, %arg3: memref<1x128xf32, #tpu.memory_space<vmem>>, %arg4: memref<128x128xbf16, #tpu.memory_space<vmem>>, %arg5: memref<1x128xf32, #tpu.memory_space<vmem>>, %arg6: memref<128x128xbf16, #tpu.memory_space<vmem>>, %arg7: memref<1x128xf32, #tpu.memory_space<vmem>>, %arg8: memref<128x128xbf16, #tpu.memory_space<vmem>>, %arg9: memref<1x128xf32, #tpu.memory_space<vmem>>, %arg10: memref<2x128xbf16, #tpu.memory_space<vmem>>) attributes {dimension_semantics = [#tpu.dimension_semantics<parallel>], iteration_bounds = array<i64: 1>, scalar_prefetch = 0 : i64, scratch_operands = 0 : i64, tpu.core_type = #tpu.core_type<tc>, window_params = [{transform_indices = @transform_0, window_bounds = array<i64: 2, 768>}, {pipeline_mode = #tpu.pipeline_mode<synchronous>, transform_indices = @transform_1, window_bounds = array<i64: 768, 128>}, {pipeline_mode = #tpu.pipeline_mode<synchronous>, transform_indices = @transform_2, window_bounds = array<i64: 1, 128>}, {pipeline_mode = #tpu.pipeline_mode<synchronous>, transform_indices = @transform_3, window_bounds = array<i64: 128, 128>}, {pipeline_mode = #tpu.pipeline_mode<synchronous>, transform_indices = @transform_4, window_bounds = array<i64: 1, 128>}, {pipeline_mode = #tpu.pipeline_mode<synchronous>, transform_indices = @transform_5, window_bounds = array<i64: 128, 128>}, {pipeline_mode = #tpu.pipeline_mode<synchronous>, transform_indices = @transform_6, window_bounds = array<i64: 1, 128>}, {pipeline_mode = #tpu.pipeline_mode<synchronous>, transform_indices = @transform_7, window_bounds = array<i64: 128, 128>}, {pipeline_mode = #tpu.pipeline_mode<synchronous>, transform_indices = @transform_8, window_bounds = array<i64: 1, 128>}, {transform_indices = @transform_9, window_bounds = array<i64: 2, 128>}]} {
    %c0 = arith.constant 0 : index
    %c0_0 = arith.constant 0 : index
    %0 = vector.load %arg1[%c0, %c0_0] : memref<2x768xf32, #tpu.memory_space<vmem>>, vector<2x768xf32>
    %1 = arith.truncf %0 : vector<2x768xf32> to vector<2x768xbf16>
    %c0_1 = arith.constant 0 : index
    %c0_2 = arith.constant 0 : index
    %2 = vector.load %arg2[%c0_1, %c0_2] : memref<768x128xbf16, #tpu.memory_space<vmem>>, vector<768x128xbf16>
    %cst = arith.constant dense<0.000000e+00> : vector<2x128xf32>
    %3 = tpu.matmul %1, %2, %cst {dimension_numbers = #tpu.dot_dimension_numbers<[1], [0], [0], [1], [0, 0, 1, 1], [], []>} : vector<2x768xbf16>, vector<768x128xbf16>, vector<2x128xf32> -> vector<2x128xf32>
    %c0_3 = arith.constant 0 : index
    %c0_4 = arith.constant 0 : index
    %4 = vector.load %arg3[%c0_3, %c0_4] : memref<1x128xf32, #tpu.memory_space<vmem>>, vector<1x128xf32>
    %5 = vector.broadcast %4 : vector<1x128xf32> to vector<2x128xf32>
    %6 = arith.addf %3, %5 : vector<2x128xf32>
    %cst_5 = arith.constant 0.000000e+00 : f32
    %7 = vector.broadcast %cst_5 : f32 to vector<2x128xf32>
    %8 = arith.maximumf %6, %7 : vector<2x128xf32>
    %9 = arith.truncf %8 : vector<2x128xf32> to vector<2x128xbf16>
    %c0_6 = arith.constant 0 : index
    %c0_7 = arith.constant 0 : index
    %10 = vector.load %arg4[%c0_6, %c0_7] : memref<128x128xbf16, #tpu.memory_space<vmem>>, vector<128x128xbf16>
    %cst_8 = arith.constant dense<0.000000e+00> : vector<2x128xf32>
    %11 = tpu.matmul %9, %10, %cst_8 {dimension_numbers = #tpu.dot_dimension_numbers<[1], [0], [0], [1], [0, 0, 1, 1], [], []>} : vector<2x128xbf16>, vector<128x128xbf16>, vector<2x128xf32> -> vector<2x128xf32>
    %c0_9 = arith.constant 0 : index
    %c0_10 = arith.constant 0 : index
    %12 = vector.load %arg5[%c0_9, %c0_10] : memref<1x128xf32, #tpu.memory_space<vmem>>, vector<1x128xf32>
    %13 = vector.broadcast %12 : vector<1x128xf32> to vector<2x128xf32>
    %14 = arith.addf %11, %13 : vector<2x128xf32>
    %cst_11 = arith.constant 0.000000e+00 : f32
    %15 = vector.broadcast %cst_11 : f32 to vector<2x128xf32>
    %16 = arith.maximumf %14, %15 : vector<2x128xf32>
    %17 = arith.truncf %16 : vector<2x128xf32> to vector<2x128xbf16>
    %c0_12 = arith.constant 0 : index
    %c0_13 = arith.constant 0 : index
    %18 = vector.load %arg6[%c0_12, %c0_13] : memref<128x128xbf16, #tpu.memory_space<vmem>>, vector<128x128xbf16>
    %cst_14 = arith.constant dense<0.000000e+00> : vector<2x128xf32>
    %19 = tpu.matmul %17, %18, %cst_14 {dimension_numbers = #tpu.dot_dimension_numbers<[1], [0], [0], [1], [0, 0, 1, 1], [], []>} : vector<2x128xbf16>, vector<128x128xbf16>, vector<2x128xf32> -> vector<2x128xf32>
    %c0_15 = arith.constant 0 : index
    %c0_16 = arith.constant 0 : index
    %20 = vector.load %arg7[%c0_15, %c0_16] : memref<1x128xf32, #tpu.memory_space<vmem>>, vector<1x128xf32>
    %21 = vector.broadcast %20 : vector<1x128xf32> to vector<2x128xf32>
    %22 = arith.addf %19, %21 : vector<2x128xf32>
    %cst_17 = arith.constant 0.000000e+00 : f32
    %23 = vector.broadcast %cst_17 : f32 to vector<2x128xf32>
    %24 = arith.maximumf %22, %23 : vector<2x128xf32>
    %25 = arith.truncf %24 : vector<2x128xf32> to vector<2x128xbf16>
    %c0_18 = arith.constant 0 : index
    %c0_19 = arith.constant 0 : index
    %26 = vector.load %arg8[%c0_18, %c0_19] : memref<128x128xbf16, #tpu.memory_space<vmem>>, vector<128x128xbf16>
    %cst_20 = arith.constant dense<0.000000e+00> : vector<2x128xf32>
    %27 = tpu.matmul %25, %26, %cst_20 {dimension_numbers = #tpu.dot_dimension_numbers<[1], [0], [0], [1], [0, 0, 1, 1], [], []>} : vector<2x128xbf16>, vector<128x128xbf16>, vector<2x128xf32> -> vector<2x128xf32>
    %c0_21 = arith.constant 0 : index
    %c0_22 = arith.constant 0 : index
    %28 = vector.load %arg9[%c0_21, %c0_22] : memref<1x128xf32, #tpu.memory_space<vmem>>, vector<1x128xf32>
    %29 = vector.broadcast %28 : vector<1x128xf32> to vector<2x128xf32>
    %30 = arith.addf %27, %29 : vector<2x128xf32>
    %31 = arith.truncf %30 : vector<2x128xf32> to vector<2x128xbf16>
    %c0_23 = arith.constant 0 : index
    %c0_24 = arith.constant 0 : index
    %32 = vector.load %arg10[%c0_23, %c0_24] : memref<2x128xbf16, #tpu.memory_space<vmem>>, vector<2x128xbf16>
    tpu.vector_store %arg10[%c0_23, %c0_24], %31 {strides = array<i32>} : memref<2x128xbf16, #tpu.memory_space<vmem>>, vector<2x128xbf16>,
    return
  }
  func.func @transform_0(%arg0: i32) -> (i32, i32) {
    %c0_i32 = arith.constant 0 : i32
    %c0_i32_0 = arith.constant 0 : i32
    return %arg0, %c0_i32 : i32, i32
  }
  func.func @transform_1(%arg0: i32) -> (i32, i32) {
    %c0_i32 = arith.constant 0 : i32
    %c0_i32_0 = arith.constant 0 : i32
    %c0_i32_1 = arith.constant 0 : i32
    return %c0_i32, %c0_i32_0 : i32, i32
  }
  func.func @transform_2(%arg0: i32) -> (i32, i32) {
    %c0_i32 = arith.constant 0 : i32
    %c0_i32_0 = arith.constant 0 : i32
    %c0_i32_1 = arith.constant 0 : i32
    return %c0_i32, %c0_i32_0 : i32, i32
  }
  func.func @transform_3(%arg0: i32) -> (i32, i32) {
    %c0_i32 = arith.constant 0 : i32
    %c0_i32_0 = arith.constant 0 : i32
    %c0_i32_1 = arith.constant 0 : i32
    return %c0_i32, %c0_i32_0 : i32, i32
  }
  func.func @transform_4(%arg0: i32) -> (i32, i32) {
    %c0_i32 = arith.constant 0 : i32
    %c0_i32_0 = arith.constant 0 : i32
    %c0_i32_1 = arith.constant 0 : i32
    return %c0_i32, %c0_i32_0 : i32, i32
  }
  func.func @transform_5(%arg0: i32) -> (i32, i32) {
    %c0_i32 = arith.constant 0 : i32
    %c0_i32_0 = arith.constant 0 : i32
    %c0_i32_1 = arith.constant 0 : i32
    return %c0_i32, %c0_i32_0 : i32, i32
  }
  func.func @transform_6(%arg0: i32) -> (i32, i32) {
    %c0_i32 = arith.constant 0 : i32
    %c0_i32_0 = arith.constant 0 : i32
    %c0_i32_1 = arith.constant 0 : i32
    return %c0_i32, %c0_i32_0 : i32, i32
  }
  func.func @transform_7(%arg0: i32) -> (i32, i32) {
    %c0_i32 = arith.constant 0 : i32
    %c0_i32_0 = arith.constant 0 : i32
    %c0_i32_1 = arith.constant 0 : i32
    return %c0_i32, %c0_i32_0 : i32, i32
  }
  func.func @transform_8(%arg0: i32) -> (i32, i32) {
    %c0_i32 = arith.constant 0 : i32
    %c0_i32_0 = arith.constant 0 : i32
    %c0_i32_1 = arith.constant 0 : i32
    return %c0_i32, %c0_i32_0 : i32, i32
  }
  func.func @transform_9(%arg0: i32) -> (i32, i32) {
    %c0_i32 = arith.constant 0 : i32
    %c0_i32_0 = arith.constant 0 : i32
    return %arg0, %c0_i32 : i32, i32
  }
}

</mosaic_0001>

<llo_original>
// kernel: tpu_custom_call.1
$region0: #{tpu_custom_call.1}
  #allocation0 [shape = 'u32[]', space=smem, size = 0x4, offset = 0x4, fixed_abs, tag = 'smem constant byte address 0x4 - core index']
  #allocation1 [shape = 'u32[72,128]{1,0:T(1,128)}', space=vmem, size = 0x9000, scoped, tag = 'internal scratch']
  %s0 = inlined_call_operand.hbm [shape: f32[2,768], index: 0, kind: input, shape index: {}]
  %s1 = inlined_call_operand.hbm [shape: bf16[768,128], index: 1, kind: input, shape index: {}]
  %s2 = inlined_call_operand.vmem [shape: f32[1,128], index: 2, kind: input, shape index: {}]
  %s3 = inlined_call_operand.hbm [shape: bf16[128,128], index: 3, kind: input, shape index: {}]
  %s4 = inlined_call_operand.vmem [shape: f32[1,128], index: 4, kind: input, shape index: {}]
  %s5 = inlined_call_operand.hbm [shape: bf16[128,128], index: 5, kind: input, shape index: {}]
  %s6 = inlined_call_operand.vmem [shape: f32[1,128], index: 6, kind: input, shape index: {}]
  %s7 = inlined_call_operand.hbm [shape: bf16[128,128], index: 7, kind: input, shape index: {}]
  %s8 = inlined_call_operand.vmem [shape: f32[1,128], index: 8, kind: input, shape index: {}]
  %s9 = inlined_call_operand.hbm [shape: bf16[2,128], index: 9, kind: output, shape index: {}]
  %s10 = sld [smem:[#allocation0]]
  $region66: #{tpu_custom_call.1} parent=0
    _
  %s12 = ssub.s32 1, %s10
  %s13 = scalar_select 0, %s12, %s10
  $region1: #{tpu_custom_call.1} parent=0
    #allocation2 [shape = 'u8[6144]{0}', space=vmem, size = 0x1800, scoped, tag = 'input window, operand 0, single buffered']
    #allocation3 [shape = 's32[1]{0}', space=sflag, size = 0x4, scoped, tag = 'scoped memory for tpu_custom_call.1']
    #allocation4 [shape = 's32[1]{0}', space=sflag, size = 0x4, scoped, tag = 'scoped memory for tpu_custom_call.1']
    #allocation5 [shape = 'u8[196608]{0}', space=vmem, size = 0x30000, scoped, tag = 'input window, operand 1, single buffered']
    #allocation6 [shape = 's32[1]{0}', space=sflag, size = 0x4, scoped, tag = 'scoped memory for tpu_custom_call.1']
    #allocation7 [shape = 'u8[32768]{0}', space=vmem, size = 0x8000, scoped, tag = 'input window, operand 3, single buffered']
    #allocation8 [shape = 'u8[32768]{0}', space=vmem, size = 0x8000, scoped, tag = 'input window, operand 5, single buffered']
    #allocation9 [shape = 's32[1]{0}', space=sflag, size = 0x4, scoped, tag = 'scoped memory for tpu_custom_call.1']
    #allocation10 [shape = 'u8[32768]{0}', space=vmem, size = 0x8000, scoped, tag = 'input window, operand 7, single buffered']
    #allocation11 [shape = 'u8[512]{0}', space=vmem, size = 0x400, scoped, tag = 'output window, operand 0, single buffered']
    %14 = vsyncpa [#allocation3], 0
    %15 = vsyncpa [#allocation6], 0
    %16 = vsyncpa [#allocation9], 0
    %17 = vsyncpa [#allocation4], 0
    // Predicated region
    $region2: #{tpu_custom_call.1} parent=1 // pred_check
      _
    $region3: #{tpu_custom_call.1} parent=1 // pred_check_branch
      %19 = sbr.rel (0) target = $region5
    $region4: #{tpu_custom_call.1} parent=1 // pred_region
      %21 = vsyncadd [#allocation3], 0
      %s23 = sshll.u32 %s0, 4
      %s24 = int_to_ptr.hbm [resolvable:$true] %s23
      %s25 = sshll.u32 [#allocation2], 4
      %s26 = int_to_ptr.vmem [resolvable:$true] %s25
      %28 = dma.hbm_to_vmem [thread:$0]  %s24, 192, %s26, [#allocation3]
    $region5: #{tpu_custom_call.1} parent=1 // pred_fallthru
      _
    // Predicated region
    $region6: #{tpu_custom_call.1} parent=1 // pred_check
      _
    $region7: #{tpu_custom_call.1} parent=1 // pred_check_branch
      %30 = sbr.rel (0) target = $region9
    $region8: #{tpu_custom_call.1} parent=1 // pred_region
      %32 = vsyncadd [#allocation6], 0
      %s33 = sshll.u32 %s1, 4
      %s34 = int_to_ptr.hbm [resolvable:$true] %s33
      %s35 = sshll.u32 [#allocation5], 4
      %s36 = int_to_ptr.vmem [resolvable:$true] %s35
      %41 = dma.hbm_to_vmem [thread:$0]  %s34, 6144, %s36, [#allocation6], 64, 64, 4
    $region9: #{tpu_custom_call.1} parent=1 // pred_fallthru
      _
    // Predicated region
    $region10: #{tpu_custom_call.1} parent=1 // pred_check
      _
    $region11: #{tpu_custom_call.1} parent=1 // pred_check_branch
      %43 = sbr.rel (0) target = $region13
    $region12: #{tpu_custom_call.1} parent=1 // pred_region
      _
    $region13: #{tpu_custom_call.1} parent=1 // pred_fallthru
      _
    // Predicated region
    $region14: #{tpu_custom_call.1} parent=1 // pred_check
      _
    $region15: #{tpu_custom_call.1} parent=1 // pred_check_branch
      %45 = sbr.rel (0) target = $region17
    $region16: #{tpu_custom_call.1} parent=1 // pred_region
      %47 = vsyncadd [#allocation6], 0
      %s48 = sshll.u32 %s3, 4
      %s49 = int_to_ptr.hbm [resolvable:$true] %s48
      %s50 = sshll.u32 [#allocation7], 4
      %s51 = int_to_ptr.vmem [resolvable:$true] %s50
      %56 = dma.hbm_to_vmem [thread:$0]  %s49, 1024, %s51, [#allocation6], 64, 64, 4
    $region17: #{tpu_custom_call.1} parent=1 // pred_fallthru
      _
    // Predicated region
    $region18: #{tpu_custom_call.1} parent=1 // pred_check
      _
    $region19: #{tpu_custom_call.1} parent=1 // pred_check_branch
      %58 = sbr.rel (0) target = $region21
    $region20: #{tpu_custom_call.1} parent=1 // pred_region
      _
    $region21: #{tpu_custom_call.1} parent=1 // pred_fallthru
      _
    // Predicated region
    $region22: #{tpu_custom_call.1} parent=1 // pred_check
      _
    $region23: #{tpu_custom_call.1} parent=1 // pred_check_branch
      %60 = sbr.rel (0) target = $region25
    $region24: #{tpu_custom_call.1} parent=1 // pred_region
      %62 = vsyncadd [#allocation9], 0
      %s63 = sshll.u32 %s5, 4
      %s64 = int_to_ptr.hbm [resolvable:$true] %s63
      %s65 = sshll.u32 [#allocation8], 4
      %s66 = int_to_ptr.vmem [resolvable:$true] %s65
      %71 = dma.hbm_to_vmem [thread:$0]  %s64, 1024, %s66, [#allocation9], 64, 64, 4
    $region25: #{tpu_custom_call.1} parent=1 // pred_fallthru
      _
    // Predicated region
    $region26: #{tpu_custom_call.1} parent=1 // pred_check
      _
    $region27: #{tpu_custom_call.1} parent=1 // pred_check_branch
      %73 = sbr.rel (0) target = $region29
    $region28: #{tpu_custom_call.1} parent=1 // pred_region
      _
    $region29: #{tpu_custom_call.1} parent=1 // pred_fallthru
      _
    // Predicated region
    $region30: #{tpu_custom_call.1} parent=1 // pred_check
      _
    $region31: #{tpu_custom_call.1} parent=1 // pred_check_branch
      %75 = sbr.rel (0) target = $region33
    $region32: #{tpu_custom_call.1} parent=1 // pred_region
      %77 = vsyncadd [#allocation9], 0
      %s78 = sshll.u32 %s7, 4
      %s79 = int_to_ptr.hbm [resolvable:$true] %s78
      %s80 = sshll.u32 [#allocation10], 4
      %s81 = int_to_ptr.vmem [resolvable:$true] %s80
      %86 = dma.hbm_to_vmem [thread:$0]  %s79, 1024, %s81, [#allocation9], 64, 64, 4
    $region33: #{tpu_custom_call.1} parent=1 // pred_fallthru
      _
    // Predicated region
    $region34: #{tpu_custom_call.1} parent=1 // pred_check
      _
    $region35: #{tpu_custom_call.1} parent=1 // pred_check_branch
      %88 = sbr.rel (0) target = $region37
    $region36: #{tpu_custom_call.1} parent=1 // pred_region
      _
    $region37: #{tpu_custom_call.1} parent=1 // pred_fallthru
      _
    // Predicated region
    $region38: #{tpu_custom_call.1} parent=1 // pred_check
      _
    $region39: #{tpu_custom_call.1} parent=1 // pred_check_branch
      %90 = sbr.rel (0) target = $region41
    $region40: #{tpu_custom_call.1} parent=1 // pred_region
      %92 = dma.done [#allocation3], 192
    $region41: #{tpu_custom_call.1} parent=1 // pred_fallthru
      _
    // Predicated region
    $region42: #{tpu_custom_call.1} parent=1 // pred_check
      _
    $region43: #{tpu_custom_call.1} parent=1 // pred_check_branch
      %94 = sbr.rel (0) target = $region45
    $region44: #{tpu_custom_call.1} parent=1 // pred_region
      %96 = dma.done [#allocation6], 6144
    $region45: #{tpu_custom_call.1} parent=1 // pred_fallthru
      _
    // Predicated region
    $region46: #{tpu_custom_call.1} parent=1 // pred_check
      _
    $region47: #{tpu_custom_call.1} parent=1 // pred_check_branch
      %98 = sbr.rel (0) target = $region49
    $region48: #{tpu_custom_call.1} parent=1 // pred_region
      %100 = dma.done [#allocation6], 1024
    $region49: #{tpu_custom_call.1} parent=1 // pred_fallthru
      _
    // Predicated region
    $region50: #{tpu_custom_call.1} parent=1 // pred_check
      _
    $region51: #{tpu_custom_call.1} parent=1 // pred_check_branch
      %102 = sbr.rel (0) target = $region53
    $region52: #{tpu_custom_call.1} parent=1 // pred_region
      %104 = dma.done [#allocation9], 1024
    $region53: #{tpu_custom_call.1} parent=1 // pred_fallthru
      _
    // Predicated region
    $region54: #{tpu_custom_call.1} parent=1 // pred_check
      _
    $region55: #{tpu_custom_call.1} parent=1 // pred_check_branch
      %106 = sbr.rel (0) target = $region57
    $region56: #{tpu_custom_call.1} parent=1 // pred_region
      %108 = dma.done [#allocation9], 1024
    $region57: #{tpu_custom_call.1} parent=1 // pred_fallthru
      _
    %v109 = vld [vmem:[#allocation2] sm:$0xff]
    %v110 = vld [vmem:[#allocation2 + $0x8] sm:$0xf]
    %113 = vst [vmem:[#allocation1] ss:$4 sm:$0xff] %v109
    %s114 = scalar_lea.vmem [#allocation1], 32
    %115 = vst [vmem:[%s114] ss:$4 sm:$0xff] %v110
    %v116 = vld.sshfl [vmem:[#allocation1] sm:$0xff pattern:$0x73625140]
    %v117 = vld.sshfl [vmem:[#allocation1 + $0x8] sm:$0xff pattern:$0x73625140]
    %v118 = vld.sshfl [vmem:[#allocation1 + $0x10] sm:$0xff pattern:$0x73625140]
    %v119 = vld.sshfl [vmem:[#allocation1 + $0x18] sm:$0xff pattern:$0x73625140]
    %v120 = vld.sshfl [vmem:[#allocation1 + $0x20] sm:$0xff pattern:$0x73625140]
    %v121 = vld.sshfl [vmem:[#allocation1 + $0x28] sm:$0xff pattern:$0x73625140]
    %v128 = vpack.c.bf16 %v116, %v116
    %v129 = vpack.c.bf16 %v117, %v117
    %v130 = vpack.c.bf16 %v118, %v118
    %v131 = vpack.c.bf16 %v119, %v119
    %v132 = vpack.c.bf16 %v120, %v120
    %v133 = vpack.c.bf16 %v121, %v121
    %v134 = vld [vmem:[#allocation5] sm:$0xf]
    %v135 = vld [vmem:[#allocation5 + $0x4] sm:$0xf]
    %v136 = vld [vmem:[#allocation5 + $0x8] sm:$0xf]
    %v137 = vld [vmem:[#allocation5 + $0xc] sm:$0xf]
    %v138 = vld [vmem:[#allocation5 + $0x10] sm:$0xf]
    %v139 = vld [vmem:[#allocation5 + $0x14] sm:$0xf]
    %v140 = vld [vmem:[#allocation5 + $0x18] sm:$0xf]
    %v141 = vld [vmem:[#allocation5 + $0x1c] sm:$0xf]
    %v142 = vld [vmem:[#allocation5 + $0x20] sm:$0xf]
    %v143 = vld [vmem:[#allocation5 + $0x24] sm:$0xf]
    %v144 = vld [vmem:[#allocation5 + $0x28] sm:$0xf]
    %v145 = vld [vmem:[#allocation5 + $0x2c] sm:$0xf]
    %v146 = vld [vmem:[#allocation5 + $0x30] sm:$0xf]
    %v147 = vld [vmem:[#allocation5 + $0x34] sm:$0xf]
    %v148 = vld [vmem:[#allocation5 + $0x38] sm:$0xf]
    %v149 = vld [vmem:[#allocation5 + $0x3c] sm:$0xf]
    %v150 = vld [vmem:[#allocation5 + $0x40] sm:$0xf]
    %v151 = vld [vmem:[#allocation5 + $0x44] sm:$0xf]
    %v152 = vld [vmem:[#allocation5 + $0x48] sm:$0xf]
    %v153 = vld [vmem:[#allocation5 + $0x4c] sm:$0xf]
    %v154 = vld [vmem:[#allocation5 + $0x50] sm:$0xf]
    %v155 = vld [vmem:[#allocation5 + $0x54] sm:$0xf]
    %v156 = vld [vmem:[#allocation5 + $0x58] sm:$0xf]
    %v157 = vld [vmem:[#allocation5 + $0x5c] sm:$0xf]
    %v158 = vld [vmem:[#allocation5 + $0x60] sm:$0xf]
    %v159 = vld [vmem:[#allocation5 + $0x64] sm:$0xf]
    %v160 = vld [vmem:[#allocation5 + $0x68] sm:$0xf]
    %v161 = vld [vmem:[#allocation5 + $0x6c] sm:$0xf]
    %v162 = vld [vmem:[#allocation5 + $0x70] sm:$0xf]
    %v163 = vld [vmem:[#allocation5 + $0x74] sm:$0xf]
    %v164 = vld [vmem:[#allocation5 + $0x78] sm:$0xf]
    %v165 = vld [vmem:[#allocation5 + $0x7c] sm:$0xf]
    %v166 = vld [vmem:[#allocation5 + $0x80] sm:$0xf]
    %v167 = vld [vmem:[#allocation5 + $0x84] sm:$0xf]
    %v168 = vld [vmem:[#allocation5 + $0x88] sm:$0xf]
    %v169 = vld [vmem:[#allocation5 + $0x8c] sm:$0xf]
    %v170 = vld [vmem:[#allocation5 + $0x90] sm:$0xf]
    %v171 = vld [vmem:[#allocation5 + $0x94] sm:$0xf]
    %v172 = vld [vmem:[#allocation5 + $0x98] sm:$0xf]
    %v173 = vld [vmem:[#allocation5 + $0x9c] sm:$0xf]
    %v174 = vld [vmem:[#allocation5 + $0xa0] sm:$0xf]
    %v175 = vld [vmem:[#allocation5 + $0xa4] sm:$0xf]
    %v176 = vld [vmem:[#allocation5 + $0xa8] sm:$0xf]
    %v177 = vld [vmem:[#allocation5 + $0xac] sm:$0xf]
    %v178 = vld [vmem:[#allocation5 + $0xb0] sm:$0xf]
    %v179 = vld [vmem:[#allocation5 + $0xb4] sm:$0xf]
    %v180 = vld [vmem:[#allocation5 + $0xb8] sm:$0xf]
    %v181 = vld [vmem:[#allocation5 + $0xbc] sm:$0xf]
    %v182 = vld [vmem:[#allocation5 + $0xc0] sm:$0xf]
    %v183 = vld [vmem:[#allocation5 + $0xc4] sm:$0xf]
    %v184 = vld [vmem:[#allocation5 + $0xc8] sm:$0xf]
    %v185 = vld [vmem:[#allocation5 + $0xcc] sm:$0xf]
    %v186 = vld [vmem:[#allocation5 + $0xd0] sm:$0xf]
    %v187 = vld [vmem:[#allocation5 + $0xd4] sm:$0xf]
    %v188 = vld [vmem:[#allocation5 + $0xd8] sm:$0xf]
    %v189 = vld [vmem:[#allocation5 + $0xdc] sm:$0xf]
    %v190 = vld [vmem:[#allocation5 + $0xe0] sm:$0xf]
    %v191 = vld [vmem:[#allocation5 + $0xe4] sm:$0xf]
    %v192 = vld [vmem:[#allocation5 + $0xe8] sm:$0xf]
    %v193 = vld [vmem:[#allocation5 + $0xec] sm:$0xf]
    %v194 = vld [vmem:[#allocation5 + $0xf0] sm:$0xf]
    %v195 = vld [vmem:[#allocation5 + $0xf4] sm:$0xf]
    %v196 = vld [vmem:[#allocation5 + $0xf8] sm:$0xf]
    %v197 = vld [vmem:[#allocation5 + $0xfc] sm:$0xf]
    %v198 = vld [vmem:[#allocation5 + $0x100] sm:$0xf]
    %v199 = vld [vmem:[#allocation5 + $0x104] sm:$0xf]
    %v200 = vld [vmem:[#allocation5 + $0x108] sm:$0xf]
    %v201 = vld [vmem:[#allocation5 + $0x10c] sm:$0xf]
    %v202 = vld [vmem:[#allocation5 + $0x110] sm:$0xf]
    %v203 = vld [vmem:[#allocation5 + $0x114] sm:$0xf]
    %v204 = vld [vmem:[#allocation5 + $0x118] sm:$0xf]
    %v205 = vld [vmem:[#allocation5 + $0x11c] sm:$0xf]
    %v206 = vld [vmem:[#allocation5 + $0x120] sm:$0xf]
    %v207 = vld [vmem:[#allocation5 + $0x124] sm:$0xf]
    %v208 = vld [vmem:[#allocation5 + $0x128] sm:$0xf]
    %v209 = vld [vmem:[#allocation5 + $0x12c] sm:$0xf]
    %v210 = vld [vmem:[#allocation5 + $0x130] sm:$0xf]
    %v211 = vld [vmem:[#allocation5 + $0x134] sm:$0xf]
    %v212 = vld [vmem:[#allocation5 + $0x138] sm:$0xf]
    %v213 = vld [vmem:[#allocation5 + $0x13c] sm:$0xf]
    %v214 = vld [vmem:[#allocation5 + $0x140] sm:$0xf]
    %v215 = vld [vmem:[#allocation5 + $0x144] sm:$0xf]
    %v216 = vld [vmem:[#allocation5 + $0x148] sm:$0xf]
    %v217 = vld [vmem:[#allocation5 + $0x14c] sm:$0xf]
    %v218 = vld [vmem:[#allocation5 + $0x150] sm:$0xf]
    %v219 = vld [vmem:[#allocation5 + $0x154] sm:$0xf]
    %v220 = vld [vmem:[#allocation5 + $0x158] sm:$0xf]
    %v221 = vld [vmem:[#allocation5 + $0x15c] sm:$0xf]
    %v222 = vld [vmem:[#allocation5 + $0x160] sm:$0xf]
    %v223 = vld [vmem:[#allocation5 + $0x164] sm:$0xf]
    %v224 = vld [vmem:[#allocation5 + $0x168] sm:$0xf]
    %v225 = vld [vmem:[#allocation5 + $0x16c] sm:$0xf]
    %v226 = vld [vmem:[#allocation5 + $0x170] sm:$0xf]
    %v227 = vld [vmem:[#allocation5 + $0x174] sm:$0xf]
    %v228 = vld [vmem:[#allocation5 + $0x178] sm:$0xf]
    %v229 = vld [vmem:[#allocation5 + $0x17c] sm:$0xf]
    %v230 = vld [vmem:[%s2] sm:$0x1]
    %v232 = vperm.slane %v230, 0
    %v330 = vunpack.c.l.b16 %v134
    %v331 = vunpack.c.l.b16 %v135
    %v332 = vunpack.c.l.b16 %v136
    %v333 = vunpack.c.l.b16 %v137
    %v334 = vunpack.c.l.b16 %v138
    %v335 = vunpack.c.l.b16 %v139
    %v336 = vunpack.c.l.b16 %v140
    %v337 = vunpack.c.l.b16 %v141
    %v338 = vunpack.c.l.b16 %v142
    %v339 = vunpack.c.l.b16 %v143
    %v340 = vunpack.c.l.b16 %v144
    %v341 = vunpack.c.l.b16 %v145
    %v342 = vunpack.c.l.b16 %v146
    %v343 = vunpack.c.l.b16 %v147
    %v344 = vunpack.c.l.b16 %v148
    %v345 = vunpack.c.l.b16 %v149
    %v346 = vunpack.c.l.b16 %v150
    %v347 = vunpack.c.l.b16 %v151
    %v348 = vunpack.c.l.b16 %v152
    %v349 = vunpack.c.l.b16 %v153
    %v350 = vunpack.c.l.b16 %v154
    %v351 = vunpack.c.l.b16 %v155
    %v352 = vunpack.c.l.b16 %v156
    %v353 = vunpack.c.l.b16 %v157
    %v354 = vunpack.c.l.b16 %v158
    %v355 = vunpack.c.l.b16 %v159
    %v356 = vunpack.c.l.b16 %v160
    %v357 = vunpack.c.l.b16 %v161
    %v358 = vunpack.c.l.b16 %v162
    %v359 = vunpack.c.l.b16 %v163
    %v360 = vunpack.c.l.b16 %v164
    %v361 = vunpack.c.l.b16 %v165
    %v362 = vunpack.c.l.b16 %v166
    %v363 = vunpack.c.l.b16 %v167
    %v364 = vunpack.c.l.b16 %v168
    %v365 = vunpack.c.l.b16 %v169
    %v366 = vunpack.c.l.b16 %v170
    %v367 = vunpack.c.l.b16 %v171
    %v368 = vunpack.c.l.b16 %v172
    %v369 = vunpack.c.l.b16 %v173
    %v370 = vunpack.c.l.b16 %v174
    %v371 = vunpack.c.l.b16 %v175
    %v372 = vunpack.c.l.b16 %v176
    %v373 = vunpack.c.l.b16 %v177
    %v374 = vunpack.c.l.b16 %v178
    %v375 = vunpack.c.l.b16 %v179
    %v376 = vunpack.c.l.b16 %v180
    %v377 = vunpack.c.l.b16 %v181
    %v378 = vunpack.c.l.b16 %v182
    %v379 = vunpack.c.l.b16 %v183
    %v380 = vunpack.c.l.b16 %v184
    %v381 = vunpack.c.l.b16 %v185
    %v382 = vunpack.c.l.b16 %v186
    %v383 = vunpack.c.l.b16 %v187
    %v384 = vunpack.c.l.b16 %v188
    %v385 = vunpack.c.l.b16 %v189
    %v386 = vunpack.c.l.b16 %v190
    %v387 = vunpack.c.l.b16 %v191
    %v388 = vunpack.c.l.b16 %v192
    %v389 = vunpack.c.l.b16 %v193
    %v390 = vunpack.c.l.b16 %v194
    %v391 = vunpack.c.l.b16 %v195
    %v392 = vunpack.c.l.b16 %v196
    %v393 = vunpack.c.l.b16 %v197
    %v394 = vunpack.c.l.b16 %v198
    %v395 = vunpack.c.l.b16 %v199
    %v396 = vunpack.c.l.b16 %v200
    %v397 = vunpack.c.l.b16 %v201
    %v398 = vunpack.c.l.b16 %v202
    %v399 = vunpack.c.l.b16 %v203
    %v400 = vunpack.c.l.b16 %v204
    %v401 = vunpack.c.l.b16 %v205
    %v402 = vunpack.c.l.b16 %v206
    %v403 = vunpack.c.l.b16 %v207
    %v404 = vunpack.c.l.b16 %v208
    %v405 = vunpack.c.l.b16 %v209
    %v406 = vunpack.c.l.b16 %v210
    %v407 = vunpack.c.l.b16 %v211
    %v408 = vunpack.c.l.b16 %v212
    %v409 = vunpack.c.l.b16 %v213
    %v410 = vunpack.c.l.b16 %v214
    %v411 = vunpack.c.l.b16 %v215
    %v412 = vunpack.c.l.b16 %v216
    %v413 = vunpack.c.l.b16 %v217
    %v414 = vunpack.c.l.b16 %v218
    %v415 = vunpack.c.l.b16 %v219
    %v416 = vunpack.c.l.b16 %v220
    %v417 = vunpack.c.l.b16 %v221
    %v418 = vunpack.c.l.b16 %v222
    %v419 = vunpack.c.l.b16 %v223
    %v420 = vunpack.c.l.b16 %v224
    %v421 = vunpack.c.l.b16 %v225
    %v422 = vunpack.c.l.b16 %v226
    %v423 = vunpack.c.l.b16 %v227
    %v424 = vunpack.c.l.b16 %v228
    %v425 = vunpack.c.l.b16 %v229
    %v426 = vpack.c.b16 %v331, %v330
    %v427 = vpack.c.b16 %v333, %v332
    %v428 = vpack.c.b16 %v335, %v334
    %v429 = vpack.c.b16 %v337, %v336
    %v430 = vpack.c.b16 %v339, %v338
    %v431 = vpack.c.b16 %v341, %v340
    %v432 = vpack.c.b16 %v343, %v342
    %v433 = vpack.c.b16 %v345, %v344
    %v434 = vpack.c.b16 %v347, %v346
    %v435 = vpack.c.b16 %v349, %v348
    %v436 = vpack.c.b16 %v351, %v350
    %v437 = vpack.c.b16 %v353, %v352
    %v438 = vpack.c.b16 %v355, %v354
    %v439 = vpack.c.b16 %v357, %v356
    %v440 = vpack.c.b16 %v359, %v358
    %v441 = vpack.c.b16 %v361, %v360
    %v442 = vpack.c.b16 %v363, %v362
    %v443 = vpack.c.b16 %v365, %v364
    %v444 = vpack.c.b16 %v367, %v366
    %v445 = vpack.c.b16 %v369, %v368
    %v446 = vpack.c.b16 %v371, %v370
    %v447 = vpack.c.b16 %v373, %v372
    %v448 = vpack.c.b16 %v375, %v374
    %v449 = vpack.c.b16 %v377, %v376
    %v450 = vpack.c.b16 %v379, %v378
    %v451 = vpack.c.b16 %v381, %v380
    %v452 = vpack.c.b16 %v383, %v382
    %v453 = vpack.c.b16 %v385, %v384
    %v454 = vpack.c.b16 %v387, %v386
    %v455 = vpack.c.b16 %v389, %v388
    %v456 = vpack.c.b16 %v391, %v390
    %v457 = vpack.c.b16 %v393, %v392
    %v458 = vpack.c.b16 %v395, %v394
    %v459 = vpack.c.b16 %v397, %v396
    %v460 = vpack.c.b16 %v399, %v398
    %v461 = vpack.c.b16 %v401, %v400
    %v462 = vpack.c.b16 %v403, %v402
    %v463 = vpack.c.b16 %v405, %v404
    %v464 = vpack.c.b16 %v407, %v406
    %v465 = vpack.c.b16 %v409, %v408
    %v466 = vpack.c.b16 %v411, %v410
    %v467 = vpack.c.b16 %v413, %v412
    %v468 = vpack.c.b16 %v415, %v414
    %v469 = vpack.c.b16 %v417, %v416
    %v470 = vpack.c.b16 %v419, %v418
    %v471 = vpack.c.b16 %v421, %v420
    %v472 = vpack.c.b16 %v423, %v422
    %v473 = vpack.c.b16 %v425, %v424
    %522 = vmatpush.bf16.msra.mxu0 %v433
    %523 = vmatpush.bf16.msra.mxu0 %v432
    %524 = vmatpush.bf16.msra.mxu0 %v431
    %525 = vmatpush.bf16.msra.mxu0 %v430
    %526 = vmatpush.bf16.msra.mxu0 %v429
    %527 = vmatpush.bf16.msra.mxu0 %v428
    %528 = vmatpush.bf16.msra.mxu0 %v427
    %529 = vmatpush.bf16.msra.mxu0 %v426
    %530 = vmatmul.bf16.gmra.mxu0 %v128
    %v531 = vpop.f32.mrf.mxu0
    %v532 = vadd.f32 %v232, %v531
    %v533 = vpop.f32.mrf.mxu0
    %534 = vdwg.mxu0
    %535 = vmatpush.bf16.msra.mxu0 %v441
    %536 = vmatpush.bf16.msra.mxu0 %v440
    %537 = vmatpush.bf16.msra.mxu0 %v439
    %538 = vmatpush.bf16.msra.mxu0 %v438
    %539 = vmatpush.bf16.msra.mxu0 %v437
    %540 = vmatpush.bf16.msra.mxu0 %v436
    %541 = vmatpush.bf16.msra.mxu0 %v435
    %542 = vmatpush.bf16.msra.mxu0 %v434
    %543 = vmatmul.bf16.gmra.mxu0 %v129
    %v544 = vpop.f32.mrf.mxu0
    %v545 = vadd.f32 %v532, %v544
    %v546 = vpop.f32.mrf.mxu0
    %547 = vdwg.mxu0
    %548 = vmatpush.bf16.msra.mxu0 %v449
    %549 = vmatpush.bf16.msra.mxu0 %v448
    %550 = vmatpush.bf16.msra.mxu0 %v447
    %551 = vmatpush.bf16.msra.mxu0 %v446
    %552 = vmatpush.bf16.msra.mxu0 %v445
    %553 = vmatpush.bf16.msra.mxu0 %v444
    %554 = vmatpush.bf16.msra.mxu0 %v443
    %555 = vmatpush.bf16.msra.mxu0 %v442
    %556 = vmatmul.bf16.gmra.mxu0 %v130
    %v557 = vpop.f32.mrf.mxu0
    %v558 = vadd.f32 %v545, %v557
    %v559 = vpop.f32.mrf.mxu0
    %560 = vdwg.mxu0
    %561 = vmatpush.bf16.msra.mxu0 %v457
    %562 = vmatpush.bf16.msra.mxu0 %v456
    %563 = vmatpush.bf16.msra.mxu0 %v455
    %564 = vmatpush.bf16.msra.mxu0 %v454
    %565 = vmatpush.bf16.msra.mxu0 %v453
    %566 = vmatpush.bf16.msra.mxu0 %v452
    %567 = vmatpush.bf16.msra.mxu0 %v451
    %568 = vmatpush.bf16.msra.mxu0 %v450
    %569 = vmatmul.bf16.gmra.mxu0 %v131
    %v570 = vpop.f32.mrf.mxu0
    %v571 = vadd.f32 %v558, %v570
    %v572 = vpop.f32.mrf.mxu0
    %573 = vdwg.mxu0
    %574 = vmatpush.bf16.msra.mxu0 %v465
    %575 = vmatpush.bf16.msra.mxu0 %v464
    %576 = vmatpush.bf16.msra.mxu0 %v463
    %577 = vmatpush.bf16.msra.mxu0 %v462
    %578 = vmatpush.bf16.msra.mxu0 %v461
    %579 = vmatpush.bf16.msra.mxu0 %v460
    %580 = vmatpush.bf16.msra.mxu0 %v459
    %581 = vmatpush.bf16.msra.mxu0 %v458
    %582 = vmatmul.bf16.gmra.mxu0 %v132
    %v583 = vpop.f32.mrf.mxu0
    %v584 = vadd.f32 %v571, %v583
    %v585 = vpop.f32.mrf.mxu0
    %586 = vdwg.mxu0
    %587 = vmatpush.bf16.msra.mxu0 %v473
    %588 = vmatpush.bf16.msra.mxu0 %v472
    %589 = vmatpush.bf16.msra.mxu0 %v471
    %590 = vmatpush.bf16.msra.mxu0 %v470
    %591 = vmatpush.bf16.msra.mxu0 %v469
    %592 = vmatpush.bf16.msra.mxu0 %v468
    %593 = vmatpush.bf16.msra.mxu0 %v467
    %594 = vmatpush.bf16.msra.mxu0 %v466
    %595 = vmatmul.bf16.gmra.mxu0 %v133
    %v596 = vpop.f32.mrf.mxu0
    %v597 = vadd.f32 %v584, %v596
    %v598 = vpop.f32.mrf.mxu0
    %599 = vdwg.mxu0
    %v600 = vmax.f32 %v597, 0.0
    %v601 = vpack.c.bf16 %v600, %v600
    %v602 = vld [vmem:[#allocation7] sm:$0xf]
    %v603 = vld [vmem:[#allocation7 + $0x4] sm:$0xf]
    %v604 = vld [vmem:[#allocation7 + $0x8] sm:$0xf]
    %v605 = vld [vmem:[#allocation7 + $0xc] sm:$0xf]
    %v606 = vld [vmem:[#allocation7 + $0x10] sm:$0xf]
    %v607 = vld [vmem:[#allocation7 + $0x14] sm:$0xf]
    %v608 = vld [vmem:[#allocation7 + $0x18] sm:$0xf]
    %v609 = vld [vmem:[#allocation7 + $0x1c] sm:$0xf]
    %v610 = vld [vmem:[#allocation7 + $0x20] sm:$0xf]
    %v611 = vld [vmem:[#allocation7 + $0x24] sm:$0xf]
    %v612 = vld [vmem:[#allocation7 + $0x28] sm:$0xf]
    %v613 = vld [vmem:[#allocation7 + $0x2c] sm:$0xf]
    %v614 = vld [vmem:[#allocation7 + $0x30] sm:$0xf]
    %v615 = vld [vmem:[#allocation7 + $0x34] sm:$0xf]
    %v616 = vld [vmem:[#allocation7 + $0x38] sm:$0xf]
    %v617 = vld [vmem:[#allocation7 + $0x3c] sm:$0xf]
    %v618 = vld [vmem:[%s4] sm:$0x1]
    %v620 = vperm.slane %v618, 0
    %v638 = vunpack.c.l.b16 %v602
    %v639 = vunpack.c.l.b16 %v603
    %v640 = vunpack.c.l.b16 %v604
    %v641 = vunpack.c.l.b16 %v605
    %v642 = vunpack.c.l.b16 %v606
    %v643 = vunpack.c.l.b16 %v607
    %v644 = vunpack.c.l.b16 %v608
    %v645 = vunpack.c.l.b16 %v609
    %v646 = vunpack.c.l.b16 %v610
    %v647 = vunpack.c.l.b16 %v611
    %v648 = vunpack.c.l.b16 %v612
    %v649 = vunpack.c.l.b16 %v613
    %v650 = vunpack.c.l.b16 %v614
    %v651 = vunpack.c.l.b16 %v615
    %v652 = vunpack.c.l.b16 %v616
    %v653 = vunpack.c.l.b16 %v617
    %v654 = vpack.c.b16 %v639, %v638
    %v655 = vpack.c.b16 %v641, %v640
    %v656 = vpack.c.b16 %v643, %v642
    %v657 = vpack.c.b16 %v645, %v644
    %v658 = vpack.c.b16 %v647, %v646
    %v659 = vpack.c.b16 %v649, %v648
    %v660 = vpack.c.b16 %v651, %v650
    %v661 = vpack.c.b16 %v653, %v652
    %670 = vmatpush.bf16.msra.mxu0 %v661
    %671 = vmatpush.bf16.msra.mxu0 %v660
    %672 = vmatpush.bf16.msra.mxu0 %v659
    %673 = vmatpush.bf16.msra.mxu0 %v658
    %674 = vmatpush.bf16.msra.mxu0 %v657
    %675 = vmatpush.bf16.msra.mxu0 %v656
    %676 = vmatpush.bf16.msra.mxu0 %v655
    %677 = vmatpush.bf16.msra.mxu0 %v654
    %678 = vmatmul.bf16.gmra.mxu0 %v601
    %v679 = vpop.f32.mrf.mxu0
    %v680 = vadd.f32 %v620, %v679
    %v681 = vpop.f32.mrf.mxu0
    %682 = vdwg.mxu0
    %v683 = vmax.f32 %v680, 0.0
    %v684 = vpack.c.bf16 %v683, %v683
    %v685 = vld [vmem:[#allocation8] sm:$0xf]
    %v686 = vld [vmem:[#allocation8 + $0x4] sm:$0xf]
    %v687 = vld [vmem:[#allocation8 + $0x8] sm:$0xf]
    %v688 = vld [vmem:[#allocation8 + $0xc] sm:$0xf]
    %v689 = vld [vmem:[#allocation8 + $0x10] sm:$0xf]
    %v690 = vld [vmem:[#allocation8 + $0x14] sm:$0xf]
    %v691 = vld [vmem:[#allocation8 + $0x18] sm:$0xf]
    %v692 = vld [vmem:[#allocation8 + $0x1c] sm:$0xf]
    %v693 = vld [vmem:[#allocation8 + $0x20] sm:$0xf]
    %v694 = vld [vmem:[#allocation8 + $0x24] sm:$0xf]
    %v695 = vld [vmem:[#allocation8 + $0x28] sm:$0xf]
    %v696 = vld [vmem:[#allocation8 + $0x2c] sm:$0xf]
    %v697 = vld [vmem:[#allocation8 + $0x30] sm:$0xf]
    %v698 = vld [vmem:[#allocation8 + $0x34] sm:$0xf]
    %v699 = vld [vmem:[#allocation8 + $0x38] sm:$0xf]
    %v700 = vld [vmem:[#allocation8 + $0x3c] sm:$0xf]
    %v701 = vld [vmem:[%s6] sm:$0x1]
    %v703 = vperm.slane %v701, 0
    %v721 = vunpack.c.l.b16 %v685
    %v722 = vunpack.c.l.b16 %v686
    %v723 = vunpack.c.l.b16 %v687
    %v724 = vunpack.c.l.b16 %v688
    %v725 = vunpack.c.l.b16 %v689
    %v726 = vunpack.c.l.b16 %v690
    %v727 = vunpack.c.l.b16 %v691
    %v728 = vunpack.c.l.b16 %v692
    %v729 = vunpack.c.l.b16 %v693
    %v730 = vunpack.c.l.b16 %v694
    %v731 = vunpack.c.l.b16 %v695
    %v732 = vunpack.c.l.b16 %v696
    %v733 = vunpack.c.l.b16 %v697
    %v734 = vunpack.c.l.b16 %v698
    %v735 = vunpack.c.l.b16 %v699
    %v736 = vunpack.c.l.b16 %v700
    %v737 = vpack.c.b16 %v722, %v721
    %v738 = vpack.c.b16 %v724, %v723
    %v739 = vpack.c.b16 %v726, %v725
    %v740 = vpack.c.b16 %v728, %v727
    %v741 = vpack.c.b16 %v730, %v729
    %v742 = vpack.c.b16 %v732, %v731
    %v743 = vpack.c.b16 %v734, %v733
    %v744 = vpack.c.b16 %v736, %v735
    %753 = vmatpush.bf16.msra.mxu0 %v744
    %754 = vmatpush.bf16.msra.mxu0 %v743
    %755 = vmatpush.bf16.msra.mxu0 %v742
    %756 = vmatpush.bf16.msra.mxu0 %v741
    %757 = vmatpush.bf16.msra.mxu0 %v740
    %758 = vmatpush.bf16.msra.mxu0 %v739
    %759 = vmatpush.bf16.msra.mxu0 %v738
    %760 = vmatpush.bf16.msra.mxu0 %v737
    %761 = vmatmul.bf16.gmra.mxu0 %v684
    %v762 = vpop.f32.mrf.mxu0
    %v763 = vadd.f32 %v703, %v762
    %v764 = vpop.f32.mrf.mxu0
    %765 = vdwg.mxu0
    %v766 = vmax.f32 %v763, 0.0
    %v767 = vpack.c.bf16 %v766, %v766
    %v768 = vld [vmem:[#allocation10] sm:$0xf]
    %v769 = vld [vmem:[#allocation10 + $0x4] sm:$0xf]
    %v770 = vld [vmem:[#allocation10 + $0x8] sm:$0xf]
    %v771 = vld [vmem:[#allocation10 + $0xc] sm:$0xf]
    %v772 = vld [vmem:[#allocation10 + $0x10] sm:$0xf]
    %v773 = vld [vmem:[#allocation10 + $0x14] sm:$0xf]
    %v774 = vld [vmem:[#allocation10 + $0x18] sm:$0xf]
    %v775 = vld [vmem:[#allocation10 + $0x1c] sm:$0xf]
    %v776 = vld [vmem:[#allocation10 + $0x20] sm:$0xf]
    %v777 = vld [vmem:[#allocation10 + $0x24] sm:$0xf]
    %v778 = vld [vmem:[#allocation10 + $0x28] sm:$0xf]
    %v779 = vld [vmem:[#allocation10 + $0x2c] sm:$0xf]
    %v780 = vld [vmem:[#allocation10 + $0x30] sm:$0xf]
    %v781 = vld [vmem:[#allocation10 + $0x34] sm:$0xf]
    %v782 = vld [vmem:[#allocation10 + $0x38] sm:$0xf]
    %v783 = vld [vmem:[#allocation10 + $0x3c] sm:$0xf]
    %v784 = vld [vmem:[%s8] sm:$0x1]
    %v786 = vperm.slane %v784, 0
    %v804 = vunpack.c.l.b16 %v768
    %v805 = vunpack.c.l.b16 %v769
    %v806 = vunpack.c.l.b16 %v770
    %v807 = vunpack.c.l.b16 %v771
    %v808 = vunpack.c.l.b16 %v772
    %v809 = vunpack.c.l.b16 %v773
    %v810 = vunpack.c.l.b16 %v774
    %v811 = vunpack.c.l.b16 %v775
    %v812 = vunpack.c.l.b16 %v776
    %v813 = vunpack.c.l.b16 %v777
    %v814 = vunpack.c.l.b16 %v778
    %v815 = vunpack.c.l.b16 %v779
    %v816 = vunpack.c.l.b16 %v780
    %v817 = vunpack.c.l.b16 %v781
    %v818 = vunpack.c.l.b16 %v782
    %v819 = vunpack.c.l.b16 %v783
    %v820 = vpack.c.b16 %v805, %v804
    %v821 = vpack.c.b16 %v807, %v806
    %v822 = vpack.c.b16 %v809, %v808
    %v823 = vpack.c.b16 %v811, %v810
    %v824 = vpack.c.b16 %v813, %v812
    %v825 = vpack.c.b16 %v815, %v814
    %v826 = vpack.c.b16 %v817, %v816
    %v827 = vpack.c.b16 %v819, %v818
    %836 = vmatpush.bf16.msra.mxu0 %v827
    %837 = vmatpush.bf16.msra.mxu0 %v826
    %838 = vmatpush.bf16.msra.mxu0 %v825
    %839 = vmatpush.bf16.msra.mxu0 %v824
    %840 = vmatpush.bf16.msra.mxu0 %v823
    %841 = vmatpush.bf16.msra.mxu0 %v822
    %842 = vmatpush.bf16.msra.mxu0 %v821
    %843 = vmatpush.bf16.msra.mxu0 %v820
    %844 = vmatmul.bf16.gmra.mxu0 %v767
    %v845 = vpop.f32.mrf.mxu0
    %v846 = vadd.f32 %v786, %v845
    %v847 = vpop.f32.mrf.mxu0
    %848 = vdwg.mxu0
    %v849 = vpack.c.bf16 %v846, %v846
    %850 = vst [vmem:[#allocation11] sm:$0x1] %v849
    // Predicated region
    $region58: #{tpu_custom_call.1} parent=1 // pred_check
      _
    $region59: #{tpu_custom_call.1} parent=1 // pred_check_branch
      %852 = sbr.rel (0) target = $region61
    $region60: #{tpu_custom_call.1} parent=1 // pred_region
      %854 = vsyncadd [#allocation4], 0
      %s856 = sshll.u32 [#allocation11], 4
      %s857 = int_to_ptr.vmem [resolvable:$true] %s856
      %s858 = sshll.u32 %s9, 4
      %s859 = int_to_ptr.hbm [resolvable:$true] %s858
      %861 = dma.vmem_to_hbm [thread:$0]  %s857, 16, %s859, [#allocation4]
    $region61: #{tpu_custom_call.1} parent=1 // pred_fallthru
      _
    // Predicated region
    $region62: #{tpu_custom_call.1} parent=1 // pred_check
      _
    $region63: #{tpu_custom_call.1} parent=1 // pred_check_branch
      %863 = sbr.rel (0) target = $region65
    $region64: #{tpu_custom_call.1} parent=1 // pred_region
      %865 = dma.done [#allocation4], 16
    $region65: #{tpu_custom_call.1} parent=1 // pred_fallthru
      _
    %866 = vsyncpa [#allocation3], 1
    %867 = vsyncpa [#allocation6], 1
    %868 = vsyncpa [#allocation9], 1
    %869 = vsyncpa [#allocation4], 1

</llo_original>
